<compile_context>
chip_gen: v7x
topology: tpu7x:2x2x1
jax: 0.10.0
libtpu: 0.0.40
codegen_flags: <defaults>
</compile_context>

<pallas_src>
import jax
import jax.numpy as jnp
from jax import lax
from jax.experimental import pallas as pl
from jax.experimental.pallas import tpu as pltpu


# ------------------------------ helpers -------------------------------------

def _round_up(n, m):
    return ((n + m - 1) // m) * m


def _pick_tile_rows(total_rows):
    """Row-tile (matmul M) size for the conv step.

    ~256 rows keeps the live (rows, C_pad) f32 feature tile at ~32 vregs (no spill
    of the bias/ReLU/pool chain) while still filling a 256-wide MXU M push on
    v6e/v7x (and a 128-multiple on v5e)."""
    if total_rows % 256 == 0:
        return 256
    best = total_rows                       # fall back to a single full-extent step
    for t in range(8, 257, 8):              # largest multiple-of-8 divisor <= 256
        if total_rows % t == 0:
            best = t
    return best


# ------------------------------ Pallas kernel --------------------------------

def _make_fused_kernel(tile_rows, total_rows, c_pad):
    """Fused: 3x3 conv (as one K=9*Cin matmul) + bias + ReLU + global-avg-pool
    + linear classifier head.

    Grid = (B, HW // tile_rows).  Per step the kernel convolves `tile_rows`
    output positions of one image and accumulates their partial spatial sum; at
    the last spatial step it normalizes by the true H*W and applies the head.
    """
    inv_hw = 1.0 / float(total_rows)
    groups = tile_rows // 8 if tile_rows % 8 == 0 else 0

    def kernel(a_ref, wc_ref, bc_ref, wh_ref, bh_ref, out_ref, acc_ref):
        # a_ref : (1, tile_rows, K_pad) bf16   tap-stacked (im2col) activation tile
        # wc_ref: (K_pad, C_pad)        bf16   conv weight, tap-major rows
        # bc_ref: (1, C_pad)            f32
        # wh_ref: (C_pad, N_pad)        bf16   head weight (f32 accumulation)
        # bh_ref: (1, N_pad)            f32
        # out_ref: (1, 1, N_pad)        f32    logits for this batch element
        # acc_ref: (8, C_pad)           f32    partial pool sums (cross-sublane
        #                                      reduce deferred to finalize)
        kt = pl.program_id(1)

        @pl.when(kt == 0)
        def _init():  # zero the pool accumulator at the start of each image
            acc_ref[...] = jnp.zeros_like(acc_ref)

        # Single K = 9*Cin matmul over the tap-stacked activation: the MXU
        # accumulates all 9 conv taps internally (no f32 partial-sum add chain
        # on the VPU, no misaligned shifted sublane loads).
        a = a_ref[0]                                              # (tile_rows, K_pad)
        feat = jnp.dot(a, wc_ref[...],                            # (tile_rows, C_pad)
                       preferred_element_type=jnp.float32)
        feat = jnp.maximum(feat + bc_ref[...], 0.0)               # bias + ReLU, f32

        # Partial global-average-pool: balanced tree of aligned full-vreg
        # (8, C_pad) adds into the resident accumulator.  Only one unmasked
        # (8, C_pad) store per step; the cross-sublane reduce happens once in
        # the finalize branch.
        if groups:
            parts = [feat[g * 8:(g + 1) * 8] for g in range(groups)]
            while len(parts) > 1:
                parts = [parts[i] + parts[i + 1] if i + 1 < len(parts) else parts[i]
                         for i in range(0, len(parts), 2)]
            acc_ref[...] += parts[0]
        else:  # odd tile_rows fallback (not hit for the shapes in this script)
            acc_ref[0:1] += jnp.sum(feat, axis=0, keepdims=True)

        @pl.when(kt == pl.num_programs(1) - 1)
        def _finalize():
            # single cross-sublane reduce + divide by the true H*W
            pooled = jnp.sum(acc_ref[...], axis=0, keepdims=True) * inv_hw  # (1, C_pad)
            # Dropout(p=0.2) in the head is identity at inference; head = Linear.
            logits = jnp.dot(pooled.astype(jnp.bfloat16), wh_ref[...],
                             preferred_element_type=jnp.float32) + bh_ref[...]
            out_ref[0] = logits.astype(out_ref.dtype)             # lane-dense (1, N_pad)

    return kernel


# ------------------------------- JAX glue ------------------------------------

def ssl_classifier_forward(x, params, tile_rows=None):
    """x: (B, Cin, H, W) float32 NCHW.  Returns logits (B, num_classes)."""
    B, Cin, H, W = x.shape
    w_conv = params["w_conv"]          # (C_feat, Cin, 3, 3)  OIHW
    b_conv = params["b_conv"]          # (C_feat,)
    w_head = params["w_head"]          # (num_classes, C_feat)  torch Linear layout
    b_head = params["b_head"]          # (num_classes,)
    C_feat = w_conv.shape[0]
    num_classes = w_head.shape[0]
    assert w_conv.shape[1:] == (Cin, 3, 3)

    HW = H * W
    if tile_rows is None:
        tile_rows = _pick_tile_rows(HW)
    assert HW % tile_rows == 0, "tile_rows must divide H*W"
    kt_steps = HW // tile_rows

    K = 9 * Cin
    K_pad = _round_up(K, 16)             # bf16 sublane-tile friendly contraction dim
    C_pad = _round_up(C_feat, 128)       # lane-dense conv output / head input
    N_pad = _round_up(num_classes, 128)  # lane-dense logits

    # Conv weight: OIHW -> tap-major (9*Cin, C_pad), bf16 (one K=9*Cin matmul in-kernel).
    wc = jnp.transpose(w_conv, (2, 3, 1, 0)).reshape(K, C_feat)
    wc = jnp.pad(wc, ((0, K_pad - K), (0, C_pad - C_feat))).astype(jnp.bfloat16)
    bc = jnp.pad(b_conv, (0, C_pad - C_feat)).reshape(1, C_pad).astype(jnp.float32)

    # Classifier head (SSLEvaluator n_hidden=None): Linear.  bf16 weight, f32 accum.
    wh = jnp.pad(w_head.T, ((0, C_pad - C_feat), (0, N_pad - num_classes)))
    wh = wh.astype(jnp.bfloat16)
    bh = jnp.pad(b_head, (0, N_pad - num_classes)).reshape(1, N_pad).astype(jnp.float32)

    # Activation: tap-stacked (im2col) LHS built once in the wrapper.  For this
    # small-Cin first conv (9*Cin << 128) the one-time XLA im2col on the tiny raw
    # input is cheap and lets the kernel issue one aligned (tile_rows, K_pad) load
    # plus one matmul per step instead of nine misaligned shifted slices + nine
    # K=Cin dots.
    # TODO(synk): for deep encoder layers (Cin >= 128) keep the activation
    # un-expanded in HBM and build taps in-kernel (pltpu.roll for the lane shifts).
    x_nhwc = jnp.transpose(x, (0, 2, 3, 1))                       # (B, H, W, Cin)
    x_sp = jnp.pad(x_nhwc, ((0, 0), (1, 1), (1, 1), (0, 0)))      # SAME pad for 3x3
    taps = [x_sp[:, di:di + H, dj:dj + W, :] for di in range(3) for dj in range(3)]
    a = jnp.concatenate(taps, axis=-1).reshape(B, HW, K)
    a = jnp.pad(a, ((0, 0), (0, 0), (0, K_pad - K))).astype(jnp.bfloat16)

    kernel = _make_fused_kernel(tile_rows, HW, C_pad)

    flops = 2 * B * HW * K_pad * C_pad + B * HW * C_pad + 2 * B * C_pad * N_pad
    bytes_accessed = (a.size * 2 + wc.size * 2 + bc.size * 4
                      + wh.size * 2 + bh.size * 4 + B * N_pad * 4)

    out = pl.pallas_call(
        kernel,
        out_shape=jax.ShapeDtypeStruct((B, 1, N_pad), jnp.float32),
        grid_spec=pltpu.PrefetchScalarGridSpec(
            num_scalar_prefetch=0,
            # batch axis: independent ("parallel", shards across v7x's 2 TCs);
            # spatial row-tile axis: pool reduction -> "arbitrary", accumulator
            # scratch resident across it.
            # TODO(synk): for B=1 inference on v7x, split the spatial reduction
            # into a leading size-2 "parallel" axis of partial pooled sums combined
            # in the wrapper so both TensorCores are used.
            grid=(B, kt_steps),
            in_specs=[
                pl.BlockSpec((1, tile_rows, K_pad), lambda b, kt: (b, kt, 0)),
                pl.BlockSpec((K_pad, C_pad), lambda b, kt: (0, 0)),
                pl.BlockSpec((1, C_pad), lambda b, kt: (0, 0)),
                pl.BlockSpec((C_pad, N_pad), lambda b, kt: (0, 0)),
                pl.BlockSpec((1, N_pad), lambda b, kt: (0, 0)),
            ],
            out_specs=pl.BlockSpec((1, 1, N_pad), lambda b, kt: (b, 0, 0)),
            scratch_shapes=[pltpu.VMEM((8, C_pad), jnp.float32)],   # pool accumulator
        ),
        compiler_params=pltpu.CompilerParams(
            dimension_semantics=("parallel", "arbitrary"),
            # 48 MiB: above v5e's 16 MiB / v6e-v7x's 32 MiB scoped defaults so
            # realistic encoder activation blocks fit, yet comfortably below
            # v7x's 64 MiB physical VMEM.
            vmem_limit_bytes=48 * 1024 * 1024,
        ),
        cost_estimate=pl.CostEstimate(flops=int(flops), transcendentals=0,
                                      bytes_accessed=int(bytes_accessed)),
    )(a, wc, bc, wh, bh)

    # TODO(synk): SSLClassifier.forward calls self.projection(repr) but discards the
    # result (no effect on the returned logits), so the projection MLP is skipped.

    return out[:, 0, :num_classes]


# ------------------------------ reference ------------------------------------

def ssl_classifier_reference(x, params):
    """Pure-JAX f32 reference (real conv) for correctness checking."""
    w_conv, b_conv = params["w_conv"], params["b_conv"]
    w_head, b_head = params["w_head"], params["b_head"]
    y = lax.conv_general_dilated(
        x, w_conv, window_strides=(1, 1), padding="SAME",
        dimension_numbers=("NCHW", "OIHW", "NCHW"))
    y = jnp.maximum(y + b_conv[None, :, None, None], 0.0)            # (B, C_feat, H, W)
    pooled = jnp.mean(y, axis=(2, 3))                                # global avg pool
    return pooled @ w_head.T + b_head[None, :]                       # linear head


# --------------------------------- main ---------------------------------------

if __name__ == "__main__":
    key = jax.random.PRNGKey(0)
    k_x, k_wc, k_bc, k_wh, k_bh = jax.random.split(key, 5)

    B, Cin, H, W = 2, 3, 16, 16
    C_feat = 32          # synthetic encoder output dim (get_encoder_output_dim analogue)
    num_classes = 5

    x = jax.random.normal(k_x, (B, Cin, H, W), dtype=jnp.float32)
    params = {
        "w_conv": 0.1 * jax.random.normal(k_wc, (C_feat, Cin, 3, 3), dtype=jnp.float32),
        "b_conv": 0.05 * jax.random.normal(k_bc, (C_feat,), dtype=jnp.float32),
        "w_head": 0.1 * jax.random.normal(k_wh, (num_classes, C_feat), dtype=jnp.float32),
        "b_head": 0.05 * jax.random.normal(k_bh, (num_classes,), dtype=jnp.float32),
    }

    fwd = jax.jit(ssl_classifier_forward, static_argnames=("tile_rows",))

    # default tiling (tile_rows=256 -> one spatial step) and explicit 2-step spatial
    # tiling (exercises the pl.when init/accumulate/finalize path).
    logits = jax.block_until_ready(fwd(x, params))
    logits_tiled = jax.block_until_ready(fwd(x, params, tile_rows=128))

    ref = ssl_classifier_reference(x, params)
    assert logits.shape == (B, num_classes)
    assert logits_tiled.shape == (B, num_classes)
    err1 = float(jnp.max(jnp.abs(logits - ref)))
    err2 = float(jnp.max(jnp.abs(logits_tiled - ref)))
    # bf16 conv / head operands (f32 accumulation) -> loosened tolerance vs f32 reference.
    assert err1 < 2e-2 and err2 < 2e-2, f"mismatch: max abs errs {err1}, {err2}"

    print("KERNEL_OK")
</pallas_src>

<mosaic_0001>
module attributes {stable_mosaic.version = 11 : i64} {
  func.func @kernel(%arg0: i32, %arg1: i32, %arg2: memref<1x256x32xbf16, #tpu.memory_space<vmem>>, %arg3: memref<32x128xbf16, #tpu.memory_space<vmem>>, %arg4: memref<1x128xf32, #tpu.memory_space<vmem>>, %arg5: memref<128x128xbf16, #tpu.memory_space<vmem>>, %arg6: memref<1x128xf32, #tpu.memory_space<vmem>>, %arg7: memref<1x1x128xf32, #tpu.memory_space<vmem>>, %arg8: memref<8x128xf32, #tpu.memory_space<vmem>>) attributes {dimension_semantics = [#tpu.dimension_semantics<parallel>, #tpu.dimension_semantics<arbitrary>], iteration_bounds = array<i64: 2, 1>, scalar_prefetch = 0 : i64, scratch_operands = 1 : i64, tpu.core_type = #tpu.core_type<tc>, window_params = [{transform_indices = @transform_0, window_bounds = array<i64: 1, 256, 32>}, {pipeline_mode = #tpu.pipeline_mode<synchronous>, transform_indices = @transform_1, window_bounds = array<i64: 32, 128>}, {pipeline_mode = #tpu.pipeline_mode<synchronous>, transform_indices = @transform_2, window_bounds = array<i64: 1, 128>}, {pipeline_mode = #tpu.pipeline_mode<synchronous>, transform_indices = @transform_3, window_bounds = array<i64: 128, 128>}, {pipeline_mode = #tpu.pipeline_mode<synchronous>, transform_indices = @transform_4, window_bounds = array<i64: 1, 128>}, {transform_indices = @transform_5, window_bounds = array<i64: 1, 1, 128>}]} {
    %c0_i32 = arith.constant 0 : i32
    %0 = arith.cmpi eq, %arg1, %c0_i32 : i32
    %1 = arith.extui %0 : i1 to i32
    %c0_i32_0 = arith.constant 0 : i32
    %2 = arith.cmpi ne, %1, %c0_i32_0 : i32
    scf.if %2 {
      %cst_14 = arith.constant 0.000000e+00 : f32
      %81 = vector.broadcast %cst_14 : f32 to vector<8x128xf32>
      %c0_15 = arith.constant 0 : index
      %c0_16 = arith.constant 0 : index
      %82 = vector.load %arg8[%c0_15, %c0_16] : memref<8x128xf32, #tpu.memory_space<vmem>>, vector<8x128xf32>
      tpu.vector_store %arg8[%c0_15, %c0_16], %81 {strides = array<i32>} : memref<8x128xf32, #tpu.memory_space<vmem>>, vector<8x128xf32>,
    } else {
    }
    %c0 = arith.constant 0 : index
    %c0_1 = arith.constant 0 : index
    %c0_2 = arith.constant 0 : index
    %3 = vector.load %arg2[%c0, %c0_1, %c0_2] : memref<1x256x32xbf16, #tpu.memory_space<vmem>>, vector<1x256x32xbf16>
    %4 = vector.shape_cast %3 : vector<1x256x32xbf16> to vector<256x32xbf16>
    %c0_3 = arith.constant 0 : index
    %c0_4 = arith.constant 0 : index
    %5 = vector.load %arg3[%c0_3, %c0_4] : memref<32x128xbf16, #tpu.memory_space<vmem>>, vector<32x128xbf16>
    %cst = arith.constant dense<0.000000e+00> : vector<256x128xf32>
    %6 = tpu.matmul %4, %5, %cst {dimension_numbers = #tpu.dot_dimension_numbers<[1], [0], [0], [1], [0, 0, 1, 1], [], []>} : vector<256x32xbf16>, vector<32x128xbf16>, vector<256x128xf32> -> vector<256x128xf32>
    %c0_5 = arith.constant 0 : index
    %c0_6 = arith.constant 0 : index
    %7 = vector.load %arg4[%c0_5, %c0_6] : memref<1x128xf32, #tpu.memory_space<vmem>>, vector<1x128xf32>
    %8 = vector.broadcast %7 : vector<1x128xf32> to vector<256x128xf32>
    %9 = arith.addf %6, %8 : vector<256x128xf32>
    %cst_7 = arith.constant 0.000000e+00 : f32
    %10 = vector.broadcast %cst_7 : f32 to vector<256x128xf32>
    %11 = arith.maximumf %9, %10 : vector<256x128xf32>
    %12 = vector.extract_strided_slice %11 {offsets = [0, 0], sizes = [8, 128], strides = [1, 1]} : vector<256x128xf32> to vector<8x128xf32>
    %13 = vector.extract_strided_slice %11 {offsets = [8, 0], sizes = [8, 128], strides = [1, 1]} : vector<256x128xf32> to vector<8x128xf32>
    %14 = vector.extract_strided_slice %11 {offsets = [16, 0], sizes = [8, 128], strides = [1, 1]} : vector<256x128xf32> to vector<8x128xf32>
    %15 = vector.extract_strided_slice %11 {offsets = [24, 0], sizes = [8, 128], strides = [1, 1]} : vector<256x128xf32> to vector<8x128xf32>
    %16 = vector.extract_strided_slice %11 {offsets = [32, 0], sizes = [8, 128], strides = [1, 1]} : vector<256x128xf32> to vector<8x128xf32>
    %17 = vector.extract_strided_slice %11 {offsets = [40, 0], sizes = [8, 128], strides = [1, 1]} : vector<256x128xf32> to vector<8x128xf32>
    %18 = vector.extract_strided_slice %11 {offsets = [48, 0], sizes = [8, 128], strides = [1, 1]} : vector<256x128xf32> to vector<8x128xf32>
    %19 = vector.extract_strided_slice %11 {offsets = [56, 0], sizes = [8, 128], strides = [1, 1]} : vector<256x128xf32> to vector<8x128xf32>
    %20 = vector.extract_strided_slice %11 {offsets = [64, 0], sizes = [8, 128], strides = [1, 1]} : vector<256x128xf32> to vector<8x128xf32>
    %21 = vector.extract_strided_slice %11 {offsets = [72, 0], sizes = [8, 128], strides = [1, 1]} : vector<256x128xf32> to vector<8x128xf32>
    %22 = vector.extract_strided_slice %11 {offsets = [80, 0], sizes = [8, 128], strides = [1, 1]} : vector<256x128xf32> to vector<8x128xf32>
    %23 = vector.extract_strided_slice %11 {offsets = [88, 0], sizes = [8, 128], strides = [1, 1]} : vector<256x128xf32> to vector<8x128xf32>
    %24 = vector.extract_strided_slice %11 {offsets = [96, 0], sizes = [8, 128], strides = [1, 1]} : vector<256x128xf32> to vector<8x128xf32>
    %25 = vector.extract_strided_slice %11 {offsets = [104, 0], sizes = [8, 128], strides = [1, 1]} : vector<256x128xf32> to vector<8x128xf32>
    %26 = vector.extract_strided_slice %11 {offsets = [112, 0], sizes = [8, 128], strides = [1, 1]} : vector<256x128xf32> to vector<8x128xf32>
    %27 = vector.extract_strided_slice %11 {offsets = [120, 0], sizes = [8, 128], strides = [1, 1]} : vector<256x128xf32> to vector<8x128xf32>
    %28 = vector.extract_strided_slice %11 {offsets = [128, 0], sizes = [8, 128], strides = [1, 1]} : vector<256x128xf32> to vector<8x128xf32>
    %29 = vector.extract_strided_slice %11 {offsets = [136, 0], sizes = [8, 128], strides = [1, 1]} : vector<256x128xf32> to vector<8x128xf32>
    %30 = vector.extract_strided_slice %11 {offsets = [144, 0], sizes = [8, 128], strides = [1, 1]} : vector<256x128xf32> to vector<8x128xf32>
    %31 = vector.extract_strided_slice %11 {offsets = [152, 0], sizes = [8, 128], strides = [1, 1]} : vector<256x128xf32> to vector<8x128xf32>
    %32 = vector.extract_strided_slice %11 {offsets = [160, 0], sizes = [8, 128], strides = [1, 1]} : vector<256x128xf32> to vector<8x128xf32>
    %33 = vector.extract_strided_slice %11 {offsets = [168, 0], sizes = [8, 128], strides = [1, 1]} : vector<256x128xf32> to vector<8x128xf32>
    %34 = vector.extract_strided_slice %11 {offsets = [176, 0], sizes = [8, 128], strides = [1, 1]} : vector<256x128xf32> to vector<8x128xf32>
    %35 = vector.extract_strided_slice %11 {offsets = [184, 0], sizes = [8, 128], strides = [1, 1]} : vector<256x128xf32> to vector<8x128xf32>
    %36 = vector.extract_strided_slice %11 {offsets = [192, 0], sizes = [8, 128], strides = [1, 1]} : vector<256x128xf32> to vector<8x128xf32>
    %37 = vector.extract_strided_slice %11 {offsets = [200, 0], sizes = [8, 128], strides = [1, 1]} : vector<256x128xf32> to vector<8x128xf32>
    %38 = vector.extract_strided_slice %11 {offsets = [208, 0], sizes = [8, 128], strides = [1, 1]} : vector<256x128xf32> to vector<8x128xf32>
    %39 = vector.extract_strided_slice %11 {offsets = [216, 0], sizes = [8, 128], strides = [1, 1]} : vector<256x128xf32> to vector<8x128xf32>
    %40 = vector.extract_strided_slice %11 {offsets = [224, 0], sizes = [8, 128], strides = [1, 1]} : vector<256x128xf32> to vector<8x128xf32>
    %41 = vector.extract_strided_slice %11 {offsets = [232, 0], sizes = [8, 128], strides = [1, 1]} : vector<256x128xf32> to vector<8x128xf32>
    %42 = vector.extract_strided_slice %11 {offsets = [240, 0], sizes = [8, 128], strides = [1, 1]} : vector<256x128xf32> to vector<8x128xf32>
    %43 = vector.extract_strided_slice %11 {offsets = [248, 0], sizes = [8, 128], strides = [1, 1]} : vector<256x128xf32> to vector<8x128xf32>
    %44 = arith.addf %12, %13 : vector<8x128xf32>
    %45 = arith.addf %14, %15 : vector<8x128xf32>
    %46 = arith.addf %16, %17 : vector<8x128xf32>
    %47 = arith.addf %18, %19 : vector<8x128xf32>
    %48 = arith.addf %20, %21 : vector<8x128xf32>
    %49 = arith.addf %22, %23 : vector<8x128xf32>
    %50 = arith.addf %24, %25 : vector<8x128xf32>
    %51 = arith.addf %26, %27 : vector<8x128xf32>
    %52 = arith.addf %28, %29 : vector<8x128xf32>
    %53 = arith.addf %30, %31 : vector<8x128xf32>
    %54 = arith.addf %32, %33 : vector<8x128xf32>
    %55 = arith.addf %34, %35 : vector<8x128xf32>
    %56 = arith.addf %36, %37 : vector<8x128xf32>
    %57 = arith.addf %38, %39 : vector<8x128xf32>
    %58 = arith.addf %40, %41 : vector<8x128xf32>
    %59 = arith.addf %42, %43 : vector<8x128xf32>
    %60 = arith.addf %44, %45 : vector<8x128xf32>
    %61 = arith.addf %46, %47 : vector<8x128xf32>
    %62 = arith.addf %48, %49 : vector<8x128xf32>
    %63 = arith.addf %50, %51 : vector<8x128xf32>
    %64 = arith.addf %52, %53 : vector<8x128xf32>
    %65 = arith.addf %54, %55 : vector<8x128xf32>
    %66 = arith.addf %56, %57 : vector<8x128xf32>
    %67 = arith.addf %58, %59 : vector<8x128xf32>
    %68 = arith.addf %60, %61 : vector<8x128xf32>
    %69 = arith.addf %62, %63 : vector<8x128xf32>
    %70 = arith.addf %64, %65 : vector<8x128xf32>
    %71 = arith.addf %66, %67 : vector<8x128xf32>
    %72 = arith.addf %68, %69 : vector<8x128xf32>
    %73 = arith.addf %70, %71 : vector<8x128xf32>
    %74 = arith.addf %72, %73 : vector<8x128xf32>
    %c0_8 = arith.constant 0 : index
    %c0_9 = arith.constant 0 : index
    %75 = vector.load %arg8[%c0_8, %c0_9] : memref<8x128xf32, #tpu.memory_space<vmem>>, vector<8x128xf32>
    %76 = arith.addf %75, %74 : vector<8x128xf32>
    %c0_10 = arith.constant 0 : index
    %c0_11 = arith.constant 0 : index
    %77 = vector.load %arg8[%c0_10, %c0_11] : memref<8x128xf32, #tpu.memory_space<vmem>>, vector<8x128xf32>
    tpu.vector_store %arg8[%c0_10, %c0_11], %76 {strides = array<i32>} : memref<8x128xf32, #tpu.memory_space<vmem>>, vector<8x128xf32>,
    %c0_i32_12 = arith.constant 0 : i32
    %78 = arith.cmpi eq, %arg1, %c0_i32_12 : i32
    %79 = arith.extui %78 : i1 to i32
    %c0_i32_13 = arith.constant 0 : i32
    %80 = arith.cmpi ne, %79, %c0_i32_13 : i32
    scf.if %80 {
      %c0_14 = arith.constant 0 : index
      %c0_15 = arith.constant 0 : index
      %81 = vector.load %arg8[%c0_14, %c0_15] : memref<8x128xf32, #tpu.memory_space<vmem>>, vector<8x128xf32>
      %cst_16 = arith.constant dense<0.000000e+00> : vector<128xf32>
      %82 = vector.multi_reduction <add>, %81, %cst_16 [0] : vector<8x128xf32> to vector<128xf32>
      %83 = vector.shape_cast %82 : vector<128xf32> to vector<1x128xf32>
      %cst_17 = arith.constant 3.906250e-03 : f32
      %84 = vector.broadcast %cst_17 : f32 to vector<1x128xf32>
      %85 = arith.mulf %83, %84 : vector<1x128xf32>
      %86 = arith.truncf %85 : vector<1x128xf32> to vector<1x128xbf16>
      %c0_18 = arith.constant 0 : index
      %c0_19 = arith.constant 0 : index
      %87 = vector.load %arg5[%c0_18, %c0_19] : memref<128x128xbf16, #tpu.memory_space<vmem>>, vector<128x128xbf16>
      %cst_20 = arith.constant dense<0.000000e+00> : vector<1x128xf32>
      %88 = tpu.matmul %86, %87, %cst_20 {dimension_numbers = #tpu.dot_dimension_numbers<[1], [0], [0], [1], [0, 0, 1, 1], [], []>} : vector<1x128xbf16>, vector<128x128xbf16>, vector<1x128xf32> -> vector<1x128xf32>
      %c0_21 = arith.constant 0 : index
      %c0_22 = arith.constant 0 : index
      %89 = vector.load %arg6[%c0_21, %c0_22] : memref<1x128xf32, #tpu.memory_space<vmem>>, vector<1x128xf32>
      %90 = arith.addf %88, %89 : vector<1x128xf32>
      %c0_23 = arith.constant 0 : index
      %c0_24 = arith.constant 0 : index
      %c0_25 = arith.constant 0 : index
      %91 = vector.load %arg7[%c0_23, %c0_24, %c0_25] : memref<1x1x128xf32, #tpu.memory_space<vmem>>, vector<1x1x128xf32>
      %92 = vector.shape_cast %91 : vector<1x1x128xf32> to vector<1x128xf32>
      %93 = vector.shape_cast %90 : vector<1x128xf32> to vector<1x1x128xf32>
      tpu.vector_store %arg7[%c0_23, %c0_24, %c0_25], %93 {strides = array<i32>} : memref<1x1x128xf32, #tpu.memory_space<vmem>>, vector<1x1x128xf32>,
    } else {
    }
    return
  }
  func.func @transform_0(%arg0: i32, %arg1: i32) -> (i32, i32, i32) {
    %c0_i32 = arith.constant 0 : i32
    %c0_i32_0 = arith.constant 0 : i32
    return %arg0, %arg1, %c0_i32 : i32, i32, i32
  }
  func.func @transform_1(%arg0: i32, %arg1: i32) -> (i32, i32) {
    %c0_i32 = arith.constant 0 : i32
    %c0_i32_0 = arith.constant 0 : i32
    %c0_i32_1 = arith.constant 0 : i32
    return %c0_i32, %c0_i32_0 : i32, i32
  }
  func.func @transform_2(%arg0: i32, %arg1: i32) -> (i32, i32) {
    %c0_i32 = arith.constant 0 : i32
    %c0_i32_0 = arith.constant 0 : i32
    %c0_i32_1 = arith.constant 0 : i32
    return %c0_i32, %c0_i32_0 : i32, i32
  }
  func.func @transform_3(%arg0: i32, %arg1: i32) -> (i32, i32) {
    %c0_i32 = arith.constant 0 : i32
    %c0_i32_0 = arith.constant 0 : i32
    %c0_i32_1 = arith.constant 0 : i32
    return %c0_i32, %c0_i32_0 : i32, i32
  }
  func.func @transform_4(%arg0: i32, %arg1: i32) -> (i32, i32) {
    %c0_i32 = arith.constant 0 : i32
    %c0_i32_0 = arith.constant 0 : i32
    %c0_i32_1 = arith.constant 0 : i32
    return %c0_i32, %c0_i32_0 : i32, i32
  }
  func.func @transform_5(%arg0: i32, %arg1: i32) -> (i32, i32, i32) {
    %c0_i32 = arith.constant 0 : i32
    %c0_i32_0 = arith.constant 0 : i32
    %c0_i32_1 = arith.constant 0 : i32
    return %arg0, %c0_i32, %c0_i32_0 : i32, i32, i32
  }
}

</mosaic_0001>

<llo_original>
// kernel: ssl_classifier_forward.1
$region0: #{ssl_classifier_forward.1}
  #allocation0 [shape = 'u32[]', space=smem, size = 0x4, offset = 0x4, fixed_abs, tag = 'smem constant byte address 0x4 - core index']
  #allocation1 [shape = 'u32[144,128]{1,0:T(1,128)}', space=vmem, size = 0x12000, scoped, tag = 'internal scratch']
  #allocation2 [shape = 'f32[8,128]{1,0:T(8,128)}', space=vmem, size = 0x1000, scoped, tag = 'scratch operand']
  %s0 = inlined_call_operand.vmem [shape: bf16[2,256,32], index: 0, kind: input, shape index: {}]
  %s1 = inlined_call_operand.vmem [shape: bf16[32,128], index: 1, kind: input, shape index: {}]
  %s2 = inlined_call_operand.vmem [shape: f32[1,128], index: 2, kind: input, shape index: {}]
  %s3 = inlined_call_operand.vmem [shape: bf16[128,128], index: 3, kind: input, shape index: {}]
  %s4 = inlined_call_operand.vmem [shape: f32[1,128], index: 4, kind: input, shape index: {}]
  %s5 = inlined_call_operand.hbm [shape: f32[2,1,128], index: 5, kind: output, shape index: {}]
  %s6 = sld [smem:[#allocation0]]
  $region61: #{ssl_classifier_forward.1} parent=0
    _
  %s8 = ssub.s32 1, %s6
  %s9 = scalar_select 0, %s8, %s6
  $region1: #{ssl_classifier_forward.1} parent=0
    #allocation3 [shape = 'u8[1024]{0}', space=vmem, size = 0x400, scoped, tag = 'output window, operand 0']
    #allocation4 [shape = 's32[2]{0}', space=sflag, size = 0x8, scoped, tag = 'scoped memory for ssl_classifier_forward.1']
    %10 = vsyncpa [#allocation4], 0
    %s11 = scalar_lea.sflag [#allocation4], 1
    %12 = vsyncpa %s11, 0
    loop: start=0, step=1, limit=4
    $region2: #{ssl_classifier_forward.1} parent=1 // loop_pre_header
      _
    $region3: #{ssl_classifier_forward.1} parent=1 // loop_header
      %s14 = sphi 0, %s18
      %p15 = scmp.ge.s32.totalorder %s14, 4
      %s21 = sphi 0, %s33
      %s22 = sphi 0, %s29
      %s23 = sphi 0, %s21
      %s24 = sphi 0, %s22
      %s25 = sphi 0, %s23
      %s26 = sphi 0, %s24
      %s38 = sphi 0, %s40
      %s41 = sphi 0, %s38
      %s42 = sphi 0, %s41
      %s58 = sphi 0, %s42
      %s62 = sphi 0, %s62
      %s64 = sphi 0, %s62
      %s65 = sphi 0, %s64
      %s79 = sphi 0, %s65
      %s83 = sphi 0, %s83
      %s85 = sphi 0, %s83
      %s86 = sphi 0, %s85
      %s100 = sphi 0, %s86
      %s104 = sphi 0, %s104
      %s106 = sphi 0, %s104
      %s107 = sphi 0, %s106
      %s121 = sphi 0, %s107
      %s125 = sphi 0, %s125
      %s127 = sphi 0, %s125
      %s128 = sphi 0, %s127
      %s142 = sphi 0, %s128
      %s148 = sphi 0, %s150
      %s151 = sphi 0, %s148
      %s152 = sphi 0, %s151
      %s168 = sphi 0, %s152
    $region4: #{ssl_classifier_forward.1} parent=1 // loop_header_branch
      %17 = sbr.rel (%p15) target = $region8
    $region5: #{ssl_classifier_forward.1} parent=1 // loop_body
      %s19 = ssub.s32 %s14, 1
      %s20 = ssub.s32 %s14, 2
      %s27 = sadd.s32 1, %s22
      %p28 = scmp.ge.s32.totalorder %s27, 1
      %s29 = scalar_select %p28, 0, %s27
      %s30 = sadd.s32 1, %s21
      %s31 = scalar_select %p28, %s30, %s21
      %p32 = scmp.ge.s32.totalorder %s31, 2
      %s33 = scalar_select %p32, 0, %s31
      %s34 = ssub.s32 %s21, %s33
      %s35 = ssub.s32 %s22, %s29
      %s36 = sor.u32 %s34, %s35
      %p37 = scmp.eq.s32.totalorder %s36, 0
      %s39 = sadd.s32 %s38, 1
      %s40 = scalar_select %p37, %s38, %s39
      %p43 = pneg %p37
      %p44 = scmp.eq.s32.totalorder %s14, 1
      %p45 = por %p43, %p44
      %p46 = scmp.ne.s32.totalorder %s38, %s41
      %p47 = scmp.eq.s32.totalorder %s14, 0
      %p48 = por %p46, %p47
      %p49 = scmp.ne.s32.totalorder %s38, %s41
      %p50 = scmp.eq.s32.totalorder %s19, 1
      %p51 = por %p49, %p50
      %p52 = scmp.ne.s32.totalorder %s41, %s42
      %p53 = scmp.eq.s32.totalorder %s19, 0
      %p54 = por %p52, %p53
      %p55 = scmp.ne.s32.totalorder %s41, %s42
      %p56 = scmp.eq.s32.totalorder %s20, 1
      %p57 = por %p55, %p56
      %p59 = scmp.ne.s32.totalorder %s42, %s58
      %p60 = scmp.eq.s32.totalorder %s20, 0
      %p61 = por %p59, %p60
      %s63 = sadd.s32 %s62, 1
      %p66 = scmp.eq.s32.totalorder %s14, 1
      %p67 = scmp.ne.s32.totalorder %s62, %s64
      %p68 = scmp.eq.s32.totalorder %s14, 0
      %p69 = por %p67, %p68
      %p70 = scmp.ne.s32.totalorder %s62, %s64
      %p71 = scmp.eq.s32.totalorder %s19, 1
      %p72 = por %p70, %p71
      %p73 = scmp.ne.s32.totalorder %s64, %s65
      %p74 = scmp.eq.s32.totalorder %s19, 0
      %p75 = por %p73, %p74
      %p76 = scmp.ne.s32.totalorder %s64, %s65
      %p77 = scmp.eq.s32.totalorder %s20, 1
      %p78 = por %p76, %p77
      %p80 = scmp.ne.s32.totalorder %s65, %s79
      %p81 = scmp.eq.s32.totalorder %s20, 0
      %p82 = por %p80, %p81
      %s84 = sadd.s32 %s83, 1
      %p87 = scmp.eq.s32.totalorder %s14, 1
      %p88 = scmp.ne.s32.totalorder %s83, %s85
      %p89 = scmp.eq.s32.totalorder %s14, 0
      %p90 = por %p88, %p89
      %p91 = scmp.ne.s32.totalorder %s83, %s85
      %p92 = scmp.eq.s32.totalorder %s19, 1
      %p93 = por %p91, %p92
      %p94 = scmp.ne.s32.totalorder %s85, %s86
      %p95 = scmp.eq.s32.totalorder %s19, 0
      %p96 = por %p94, %p95
      %p97 = scmp.ne.s32.totalorder %s85, %s86
      %p98 = scmp.eq.s32.totalorder %s20, 1
      %p99 = por %p97, %p98
      %p101 = scmp.ne.s32.totalorder %s86, %s100
      %p102 = scmp.eq.s32.totalorder %s20, 0
      %p103 = por %p101, %p102
      %s105 = sadd.s32 %s104, 1
      %p108 = scmp.eq.s32.totalorder %s14, 1
      %p109 = scmp.ne.s32.totalorder %s104, %s106
      %p110 = scmp.eq.s32.totalorder %s14, 0
      %p111 = por %p109, %p110
      %p112 = scmp.ne.s32.totalorder %s104, %s106
      %p113 = scmp.eq.s32.totalorder %s19, 1
      %p114 = por %p112, %p113
      %p115 = scmp.ne.s32.totalorder %s106, %s107
      %p116 = scmp.eq.s32.totalorder %s19, 0
      %p117 = por %p115, %p116
      %p118 = scmp.ne.s32.totalorder %s106, %s107
      %p119 = scmp.eq.s32.totalorder %s20, 1
      %p120 = por %p118, %p119
      %p122 = scmp.ne.s32.totalorder %s107, %s121
      %p123 = scmp.eq.s32.totalorder %s20, 0
      %p124 = por %p122, %p123
      %s126 = sadd.s32 %s125, 1
      %p129 = scmp.eq.s32.totalorder %s14, 1
      %p130 = scmp.ne.s32.totalorder %s125, %s127
      %p131 = scmp.eq.s32.totalorder %s14, 0
      %p132 = por %p130, %p131
      %p133 = scmp.ne.s32.totalorder %s125, %s127
      %p134 = scmp.eq.s32.totalorder %s19, 1
      %p135 = por %p133, %p134
      %p136 = scmp.ne.s32.totalorder %s127, %s128
      %p137 = scmp.eq.s32.totalorder %s19, 0
      %p138 = por %p136, %p137
      %p139 = scmp.ne.s32.totalorder %s127, %s128
      %p140 = scmp.eq.s32.totalorder %s20, 1
      %p141 = por %p139, %p140
      %p143 = scmp.ne.s32.totalorder %s128, %s142
      %p144 = scmp.eq.s32.totalorder %s20, 0
      %p145 = por %p143, %p144
      %s146 = ssub.s32 %s21, %s33
      %p147 = scmp.eq.s32.totalorder %s146, 0
      %s149 = sadd.s32 %s148, 1
      %s150 = scalar_select %p147, %s148, %s149
      %p153 = pneg %p147
      %p154 = scmp.eq.s32.totalorder %s14, 1
      %p155 = por %p153, %p154
      %p156 = scmp.ne.s32.totalorder %s148, %s151
      %p157 = scmp.eq.s32.totalorder %s14, 0
      %p158 = por %p156, %p157
      %p159 = scmp.ne.s32.totalorder %s148, %s151
      %p160 = scmp.eq.s32.totalorder %s19, 1
      %p161 = por %p159, %p160
      %p162 = scmp.ne.s32.totalorder %s151, %s152
      %p163 = scmp.eq.s32.totalorder %s19, 0
      %p164 = por %p162, %p163
      %p165 = scmp.ne.s32.totalorder %s151, %s152
      %p166 = scmp.eq.s32.totalorder %s20, 1
      %p167 = por %p165, %p166
      %p169 = scmp.ne.s32.totalorder %s152, %s168
      %p170 = scmp.eq.s32.totalorder %s20, 0
      %p171 = por %p169, %p170
      %p172 = scmp.le.s32.totalorder 1, %s14
      %p173 = scmp.lt.s32.totalorder %s14, 3
      %p174 = pnand %p172, %p173
      %p175 = pneg %p174
      // Predicated region
      $region9: #{ssl_classifier_forward.1} parent=5 // pred_check
        _
      $region10: #{ssl_classifier_forward.1} parent=5 // pred_check_branch
        %177 = sbr.rel (%p174) target = $region12
      $region11: #{ssl_classifier_forward.1} parent=5 // pred_region
        %s178 = ssub.s32 %s14, 1
        // Predicated region
        $region13: #{ssl_classifier_forward.1} parent=11 // pred_check
          %p179 = pneg %p75
        $region14: #{ssl_classifier_forward.1} parent=11 // pred_check_branch
          %181 = sbr.rel (%p179) target = $region16
        $region15: #{ssl_classifier_forward.1} parent=11 // pred_region
          _
        $region16: #{ssl_classifier_forward.1} parent=11 // pred_fallthru
          _
        // Predicated region
        $region17: #{ssl_classifier_forward.1} parent=11 // pred_check
          %p182 = pneg %p96
        $region18: #{ssl_classifier_forward.1} parent=11 // pred_check_branch
          %184 = sbr.rel (%p182) target = $region20
        $region19: #{ssl_classifier_forward.1} parent=11 // pred_region
          _
        $region20: #{ssl_classifier_forward.1} parent=11 // pred_fallthru
          _
        // Predicated region
        $region21: #{ssl_classifier_forward.1} parent=11 // pred_check
          %p185 = pneg %p117
        $region22: #{ssl_classifier_forward.1} parent=11 // pred_check_branch
          %187 = sbr.rel (%p185) target = $region24
        $region23: #{ssl_classifier_forward.1} parent=11 // pred_region
          _
        $region24: #{ssl_classifier_forward.1} parent=11 // pred_fallthru
          _
        // Predicated region
        $region25: #{ssl_classifier_forward.1} parent=11 // pred_check
          %p188 = pneg %p138
        $region26: #{ssl_classifier_forward.1} parent=11 // pred_check_branch
          %190 = sbr.rel (%p188) target = $region28
        $region27: #{ssl_classifier_forward.1} parent=11 // pred_region
          _
        $region28: #{ssl_classifier_forward.1} parent=11 // pred_fallthru
          _
      $region12: #{ssl_classifier_forward.1} parent=5 // pred_fallthru
        _
      %p191 = scmp.lt.s32.totalorder %s14, 2
      // Predicated region
      $region29: #{ssl_classifier_forward.1} parent=5 // pred_check
        %p192 = pneg %p191
      $region30: #{ssl_classifier_forward.1} parent=5 // pred_check_branch
        %194 = sbr.rel (%p192) target = $region32
      $region31: #{ssl_classifier_forward.1} parent=5 // pred_region
        // Predicated region
        $region33: #{ssl_classifier_forward.1} parent=31 // pred_check
          %p195 = pneg %p48
        $region34: #{ssl_classifier_forward.1} parent=31 // pred_check_branch
          %197 = sbr.rel (%p195) target = $region36
        $region35: #{ssl_classifier_forward.1} parent=31 // pred_region
          %s198 = smul.u32 32, %s22
          %p199 = scmp.lt.s32.totalorder %s21, 1
          %s200 = scalar_select %p199, %s21, 1
          %p201 = scmp.lt.s32.totalorder %s198, 31
          %s202 = scalar_select %p201, %s198, 31
          %s203 = smul.addr %s200, 32
          %s204 = sadd.s32 %s202, %s203
          %s205 = smul.addr %s204, 4
          %s206 = scalar_lea.vmem %s0, %s205
          %s207 = smul.u32 32, %s22
        $region36: #{ssl_classifier_forward.1} parent=31 // pred_fallthru
          _
      $region32: #{ssl_classifier_forward.1} parent=5 // pred_fallthru
        _
      %p208 = scmp.le.s32.totalorder 1, %s14
      %p209 = scmp.lt.s32.totalorder %s14, 3
      %p210 = pnand %p208, %p209
      %p211 = pneg %p210
      // Predicated region
      $region37: #{ssl_classifier_forward.1} parent=5 // pred_check
        _
      $region38: #{ssl_classifier_forward.1} parent=5 // pred_check_branch
        %213 = sbr.rel (%p210) target = $region40
      $region39: #{ssl_classifier_forward.1} parent=5 // pred_region
        %s214 = ssub.s32 %s14, 1
        %s215 = smul.u32 32, %s24
        %p216 = scmp.lt.s32.totalorder %s23, 1
        %s217 = scalar_select %p216, %s23, 1
        %p218 = scmp.lt.s32.totalorder %s215, 31
        %s219 = scalar_select %p218, %s215, 31
        %s220 = smul.addr %s217, 32
        %s221 = sadd.s32 %s219, %s220
        %s222 = smul.addr %s221, 4
        %s223 = scalar_lea.vmem %s0, %s222
        %p224 = pneg %p54
        %p225 = pneg %p51
        %p226 = pneg %p75
        %p227 = pneg %p72
        %p228 = pneg %p96
        %p229 = pneg %p93
        %p230 = pneg %p117
        %p231 = pneg %p114
        %p232 = pneg %p138
        %p233 = pneg %p135
        %p234 = pneg %p164
        %p235 = pneg %p161
        %s236 = sand.u32 %s151, 1
        %s237 = scalar_lea.sflag [#allocation4], %s236
        %s238 = sand.u32 %s151, 1
        %s239 = scalar_lea.vmem [#allocation3], %s238
        %s240 = smul.u32 32, %s24
        %p241 = scmp.lt.s32.totalorder %s23, 1
        %s242 = scalar_select %p241, %s23, 1
        %p243 = scmp.lt.s32.totalorder %s240, 31
        %s244 = scalar_select %p243, %s240, 31
        %s245 = smul.addr %s242, 32
        %s246 = sadd.s32 %s244, %s245
        %s247 = smul.addr %s246, 4
        %s248 = scalar_lea.vmem %s0, %s247
        %s249 = smul.u32 32, %s24
        %p251 = scmp.eq.s32.totalorder %s24, 0
        // Predicated region
        $region41: #{ssl_classifier_forward.1} parent=39 // pred_check
          %p252 = pneg %p251
        $region42: #{ssl_classifier_forward.1} parent=39 // pred_check_branch
          %254 = sbr.rel (%p252) target = $region44
        $region43: #{ssl_classifier_forward.1} parent=39 // pred_region
          %255 = vst [vmem:[#allocation2] sm:$0xff] 0.0
        $region44: #{ssl_classifier_forward.1} parent=39 // pred_fallthru
          _
        %v256 = vld [vmem:[%s248] sm:$0xf]
        %v257 = vld [vmem:[%s248 + $0x4] sm:$0xf]
        %v258 = vld [vmem:[%s248 + $0x8] sm:$0xf]
        %v259 = vld [vmem:[%s248 + $0xc] sm:$0xf]
        %v260 = vld [vmem:[%s248 + $0x10] sm:$0xf]
        %v261 = vld [vmem:[%s248 + $0x14] sm:$0xf]
        %v262 = vld [vmem:[%s248 + $0x18] sm:$0xf]
        %v263 = vld [vmem:[%s248 + $0x1c] sm:$0xf]
        %v264 = vld [vmem:[%s248 + $0x20] sm:$0xf]
        %v265 = vld [vmem:[%s248 + $0x24] sm:$0xf]
        %v266 = vld [vmem:[%s248 + $0x28] sm:$0xf]
        %v267 = vld [vmem:[%s248 + $0x2c] sm:$0xf]
        %v268 = vld [vmem:[%s248 + $0x30] sm:$0xf]
        %v269 = vld [vmem:[%s248 + $0x34] sm:$0xf]
        %v270 = vld [vmem:[%s248 + $0x38] sm:$0xf]
        %v271 = vld [vmem:[%s248 + $0x3c] sm:$0xf]
        %v272 = vld [vmem:[%s248 + $0x40] sm:$0xf]
        %v273 = vld [vmem:[%s248 + $0x44] sm:$0xf]
        %v274 = vld [vmem:[%s248 + $0x48] sm:$0xf]
        %v275 = vld [vmem:[%s248 + $0x4c] sm:$0xf]
        %v276 = vld [vmem:[%s248 + $0x50] sm:$0xf]
        %v277 = vld [vmem:[%s248 + $0x54] sm:$0xf]
        %v278 = vld [vmem:[%s248 + $0x58] sm:$0xf]
        %v279 = vld [vmem:[%s248 + $0x5c] sm:$0xf]
        %v280 = vld [vmem:[%s248 + $0x60] sm:$0xf]
        %v281 = vld [vmem:[%s248 + $0x64] sm:$0xf]
        %v282 = vld [vmem:[%s248 + $0x68] sm:$0xf]
        %v283 = vld [vmem:[%s248 + $0x6c] sm:$0xf]
        %v284 = vld [vmem:[%s248 + $0x70] sm:$0xf]
        %v285 = vld [vmem:[%s248 + $0x74] sm:$0xf]
        %v286 = vld [vmem:[%s248 + $0x78] sm:$0xf]
        %v287 = vld [vmem:[%s248 + $0x7c] sm:$0xf]
        %v288 = vld [vmem:[%s1] sm:$0xf]
        %v289 = vld [vmem:[%s1 + $0x4] sm:$0xf]
        %v290 = vld [vmem:[%s1 + $0x8] sm:$0xf]
        %v291 = vld [vmem:[%s1 + $0xc] sm:$0xf]
        %v292 = vld [vmem:[%s2] sm:$0x1]
        %v294 = vlaneseq
        %v295 = vshrl.u32 %v294, 7
        %v296 = vsub.s32 0, %v295
        %v297 = vrot.slane %v292, %v296
        %v331 = vunpack.c.l.b16 %v256
        %v332 = vunpack.c.l.b16 %v257
        %v333 = vunpack.c.l.b16 %v258
        %v334 = vunpack.c.l.b16 %v259
        %v335 = vunpack.c.l.b16 %v260
        %v336 = vunpack.c.l.b16 %v261
        %v337 = vunpack.c.l.b16 %v262
        %v338 = vunpack.c.l.b16 %v263
        %v339 = vunpack.c.l.b16 %v264
        %v340 = vunpack.c.l.b16 %v265
        %v341 = vunpack.c.l.b16 %v266
        %v342 = vunpack.c.l.b16 %v267
        %v343 = vunpack.c.l.b16 %v268
        %v344 = vunpack.c.l.b16 %v269
        %v345 = vunpack.c.l.b16 %v270
        %v346 = vunpack.c.l.b16 %v271
        %v347 = vunpack.c.l.b16 %v272
        %v348 = vunpack.c.l.b16 %v273
        %v349 = vunpack.c.l.b16 %v274
        %v350 = vunpack.c.l.b16 %v275
        %v351 = vunpack.c.l.b16 %v276
        %v352 = vunpack.c.l.b16 %v277
        %v353 = vunpack.c.l.b16 %v278
        %v354 = vunpack.c.l.b16 %v279
        %v355 = vunpack.c.l.b16 %v280
        %v356 = vunpack.c.l.b16 %v281
        %v357 = vunpack.c.l.b16 %v282
        %v358 = vunpack.c.l.b16 %v283
        %v359 = vunpack.c.l.b16 %v284
        %v360 = vunpack.c.l.b16 %v285
        %v361 = vunpack.c.l.b16 %v286
        %v362 = vunpack.c.l.b16 %v287
        %v363 = vpack.c.b16 %v332, %v331
        %v364 = vpack.c.b16 %v334, %v333
        %v365 = vpack.c.b16 %v336, %v335
        %v366 = vpack.c.b16 %v338, %v337
        %v367 = vpack.c.b16 %v340, %v339
        %v368 = vpack.c.b16 %v342, %v341
        %v369 = vpack.c.b16 %v344, %v343
        %v370 = vpack.c.b16 %v346, %v345
        %v371 = vpack.c.b16 %v348, %v347
        %v372 = vpack.c.b16 %v350, %v349
        %v373 = vpack.c.b16 %v352, %v351
        %v374 = vpack.c.b16 %v354, %v353
        %v375 = vpack.c.b16 %v356, %v355
        %v376 = vpack.c.b16 %v358, %v357
        %v377 = vpack.c.b16 %v360, %v359
        %v378 = vpack.c.b16 %v362, %v361
        %v383 = vunpack.c.l.b16 %v288
        %v384 = vunpack.c.l.b16 %v289
        %v385 = vunpack.c.l.b16 %v290
        %v386 = vunpack.c.l.b16 %v291
        %v387 = vpack.c.b16 %v384, %v383
        %v388 = vpack.c.b16 %v386, %v385
        %vm391 = vcmask 261120
        %v393 = vsel %vm391, %v363, 0
        %v396 = vsel %vm391, %v364, 0
        %v399 = vsel %vm391, %v365, 0
        %v402 = vsel %vm391, %v366, 0
        %v405 = vsel %vm391, %v367, 0
        %v408 = vsel %vm391, %v368, 0
        %v411 = vsel %vm391, %v369, 0
        %v414 = vsel %vm391, %v370, 0
        %v417 = vsel %vm391, %v371, 0
        %v420 = vsel %vm391, %v372, 0
        %v423 = vsel %vm391, %v373, 0
        %v426 = vsel %vm391, %v374, 0
        %v429 = vsel %vm391, %v375, 0
        %v432 = vsel %vm391, %v376, 0
        %v435 = vsel %vm391, %v377, 0
        %v438 = vsel %vm391, %v378, 0
        %440 = vmatprep.subr.bf16.mxu0 0
        %441 = vmatpush1.bf16.msra.mxu0 %v387
        %442 = vmatprep.subr.bf16.mxu0 0
        %443 = vmatpush1.bf16.msra.mxu0 %v388
        %444 = vmatprep.subr.bf16.mxu0 0
        %445 = vmatpush1.bf16.msra.mxu0 0
        %446 = vmatprep.subr.bf16.mxu0 0
        %447 = vmatpush1.bf16.msra.mxu0 0
        %448 = vmatprep.subr.bf16.mxu0 0
        %449 = vmatpush1.bf16.msra.mxu0 0
        %450 = vmatprep.subr.bf16.mxu0 0
        %451 = vmatpush1.bf16.msra.mxu0 0
        %452 = vmatprep.subr.bf16.mxu0 0
        %453 = vmatpush1.bf16.msra.mxu0 0
        %454 = vmatprep.subr.bf16.mxu0 0
        %455 = vmatpush1.bf16.msra.mxu0 0
        %456 = vmatprep.subr.bf16.mxu0 0
        %457 = vmatpush1.bf16.msra.mxu0 0
        %458 = vmatprep.subr.bf16.mxu0 0
        %459 = vmatpush1.bf16.msra.mxu0 0
        %460 = vmatprep.subr.bf16.mxu0 0
        %461 = vmatpush1.bf16.msra.mxu0 0
        %462 = vmatprep.subr.bf16.mxu0 0
        %463 = vmatpush1.bf16.msra.mxu0 0
        %464 = vmatprep.subr.bf16.mxu0 0
        %465 = vmatpush1.bf16.msra.mxu0 0
        %466 = vmatprep.subr.bf16.mxu0 0
        %467 = vmatpush1.bf16.msra.mxu0 0
        %468 = vmatprep.subr.bf16.mxu0 0
        %469 = vmatpush1.bf16.msra.mxu0 0
        %470 = vmatprep.subr.bf16.mxu0 0
        %471 = vmatpush1.bf16.msra.mxu0 0
        %472 = vmatprep.mubr.bf16.mxu0 0
        %473 = vmatmul.mubr.bf16.gmra.mrb[0].mxu0 %v393
        %v474 = vpop.f32.mrb[0].mxu0
        %v475 = vadd.f32 %v297, %v474
        %v476 = vpop.f32.mrb[0].mxu0
        %v477 = vpop.f32.mrb[0].mxu0
        %v478 = vadd.f32 %v297, %v477
        %v479 = vpop.f32.mrb[0].mxu0
        %480 = vmatprep.mubr.bf16.mxu0 0
        %481 = vmatmul.mubr.bf16.gmra.mrb[0].mxu0 %v396
        %v482 = vpop.f32.mrb[0].mxu0
        %v483 = vadd.f32 %v297, %v482
        %v484 = vpop.f32.mrb[0].mxu0
        %v485 = vpop.f32.mrb[0].mxu0
        %v486 = vadd.f32 %v297, %v485
        %v487 = vpop.f32.mrb[0].mxu0
        %488 = vmatprep.mubr.bf16.mxu0 0
        %489 = vmatmul.mubr.bf16.gmra.mrb[0].mxu0 %v399
        %v490 = vpop.f32.mrb[0].mxu0
        %v491 = vadd.f32 %v297, %v490
        %v492 = vpop.f32.mrb[0].mxu0
        %v493 = vpop.f32.mrb[0].mxu0
        %v494 = vadd.f32 %v297, %v493
        %v495 = vpop.f32.mrb[0].mxu0
        %496 = vmatprep.mubr.bf16.mxu0 0
        %497 = vmatmul.mubr.bf16.gmra.mrb[0].mxu0 %v402
        %v498 = vpop.f32.mrb[0].mxu0
        %v499 = vadd.f32 %v297, %v498
        %v500 = vpop.f32.mrb[0].mxu0
        %v501 = vpop.f32.mrb[0].mxu0
        %v502 = vadd.f32 %v297, %v501
        %v503 = vpop.f32.mrb[0].mxu0
        %504 = vmatprep.mubr.bf16.mxu0 0
        %505 = vmatmul.mubr.bf16.gmra.mrb[0].mxu0 %v405
        %v506 = vpop.f32.mrb[0].mxu0
        %v507 = vadd.f32 %v297, %v506
        %v508 = vpop.f32.mrb[0].mxu0
        %v509 = vpop.f32.mrb[0].mxu0
        %v510 = vadd.f32 %v297, %v509
        %v511 = vpop.f32.mrb[0].mxu0
        %512 = vmatprep.mubr.bf16.mxu0 0
        %513 = vmatmul.mubr.bf16.gmra.mrb[0].mxu0 %v408
        %v514 = vpop.f32.mrb[0].mxu0
        %v515 = vadd.f32 %v297, %v514
        %v516 = vpop.f32.mrb[0].mxu0
        %v517 = vpop.f32.mrb[0].mxu0
        %v518 = vadd.f32 %v297, %v517
        %v519 = vpop.f32.mrb[0].mxu0
        %520 = vmatprep.mubr.bf16.mxu0 0
        %521 = vmatmul.mubr.bf16.gmra.mrb[0].mxu0 %v411
        %v522 = vpop.f32.mrb[0].mxu0
        %v523 = vadd.f32 %v297, %v522
        %v524 = vpop.f32.mrb[0].mxu0
        %v525 = vpop.f32.mrb[0].mxu0
        %v526 = vadd.f32 %v297, %v525
        %v527 = vpop.f32.mrb[0].mxu0
        %528 = vmatprep.mubr.bf16.mxu0 0
        %529 = vmatmul.mubr.bf16.gmra.mrb[0].mxu0 %v414
        %v530 = vpop.f32.mrb[0].mxu0
        %v531 = vadd.f32 %v297, %v530
        %v532 = vpop.f32.mrb[0].mxu0
        %v533 = vpop.f32.mrb[0].mxu0
        %v534 = vadd.f32 %v297, %v533
        %v535 = vpop.f32.mrb[0].mxu0
        %536 = vmatprep.mubr.bf16.mxu0 0
        %537 = vmatmul.mubr.bf16.gmra.mrb[0].mxu0 %v417
        %v538 = vpop.f32.mrb[0].mxu0
        %v539 = vadd.f32 %v297, %v538
        %v540 = vpop.f32.mrb[0].mxu0
        %v541 = vpop.f32.mrb[0].mxu0
        %v542 = vadd.f32 %v297, %v541
        %v543 = vpop.f32.mrb[0].mxu0
        %544 = vmatprep.mubr.bf16.mxu0 0
        %545 = vmatmul.mubr.bf16.gmra.mrb[0].mxu0 %v420
        %v546 = vpop.f32.mrb[0].mxu0
        %v547 = vadd.f32 %v297, %v546
        %v548 = vpop.f32.mrb[0].mxu0
        %v549 = vpop.f32.mrb[0].mxu0
        %v550 = vadd.f32 %v297, %v549
        %v551 = vpop.f32.mrb[0].mxu0
        %552 = vmatprep.mubr.bf16.mxu0 0
        %553 = vmatmul.mubr.bf16.gmra.mrb[0].mxu0 %v423
        %v554 = vpop.f32.mrb[0].mxu0
        %v555 = vadd.f32 %v297, %v554
        %v556 = vpop.f32.mrb[0].mxu0
        %v557 = vpop.f32.mrb[0].mxu0
        %v558 = vadd.f32 %v297, %v557
        %v559 = vpop.f32.mrb[0].mxu0
        %560 = vmatprep.mubr.bf16.mxu0 0
        %561 = vmatmul.mubr.bf16.gmra.mrb[0].mxu0 %v426
        %v562 = vpop.f32.mrb[0].mxu0
        %v563 = vadd.f32 %v297, %v562
        %v564 = vpop.f32.mrb[0].mxu0
        %v565 = vpop.f32.mrb[0].mxu0
        %v566 = vadd.f32 %v297, %v565
        %v567 = vpop.f32.mrb[0].mxu0
        %568 = vmatprep.mubr.bf16.mxu0 0
        %569 = vmatmul.mubr.bf16.gmra.mrb[0].mxu0 %v429
        %v570 = vpop.f32.mrb[0].mxu0
        %v571 = vadd.f32 %v297, %v570
        %v572 = vpop.f32.mrb[0].mxu0
        %v573 = vpop.f32.mrb[0].mxu0
        %v574 = vadd.f32 %v297, %v573
        %v575 = vpop.f32.mrb[0].mxu0
        %576 = vmatprep.mubr.bf16.mxu0 0
        %577 = vmatmul.mubr.bf16.gmra.mrb[0].mxu0 %v432
        %v578 = vpop.f32.mrb[0].mxu0
        %v579 = vadd.f32 %v297, %v578
        %v580 = vpop.f32.mrb[0].mxu0
        %v581 = vpop.f32.mrb[0].mxu0
        %v582 = vadd.f32 %v297, %v581
        %v583 = vpop.f32.mrb[0].mxu0
        %584 = vmatprep.mubr.bf16.mxu0 0
        %585 = vmatmul.mubr.bf16.gmra.mrb[0].mxu0 %v435
        %v586 = vpop.f32.mrb[0].mxu0
        %v587 = vadd.f32 %v297, %v586
        %v588 = vpop.f32.mrb[0].mxu0
        %v589 = vpop.f32.mrb[0].mxu0
        %v590 = vadd.f32 %v297, %v589
        %v591 = vpop.f32.mrb[0].mxu0
        %592 = vmatprep.mubr.bf16.mxu0 0
        %593 = vmatmul.mubr.bf16.gmra.mrb[0].mxu0 %v438
        %v594 = vpop.f32.mrb[0].mxu0
        %v595 = vadd.f32 %v297, %v594
        %v596 = vpop.f32.mrb[0].mxu0
        %v597 = vpop.f32.mrb[0].mxu0
        %v598 = vadd.f32 %v297, %v597
        %v599 = vpop.f32.mrb[0].mxu0
        %600 = vdwg.mxu0
        %v601 = vmax.f32 %v475, 0.0
        %v602 = vmax.f32 %v478, 0.0
        %v603 = vmax.f32 %v483, 0.0
        %v604 = vmax.f32 %v486, 0.0
        %v605 = vmax.f32 %v491, 0.0
        %v606 = vmax.f32 %v494, 0.0
        %v607 = vmax.f32 %v499, 0.0
        %v608 = vmax.f32 %v502, 0.0
        %v609 = vmax.f32 %v507, 0.0
        %v610 = vmax.f32 %v510, 0.0
        %v611 = vmax.f32 %v515, 0.0
        %v612 = vmax.f32 %v518, 0.0
        %v613 = vmax.f32 %v523, 0.0
        %v614 = vmax.f32 %v526, 0.0
        %v615 = vmax.f32 %v531, 0.0
        %v616 = vmax.f32 %v534, 0.0
        %v617 = vmax.f32 %v539, 0.0
        %v618 = vmax.f32 %v542, 0.0
        %v619 = vmax.f32 %v547, 0.0
        %v620 = vmax.f32 %v550, 0.0
        %v621 = vmax.f32 %v555, 0.0
        %v622 = vmax.f32 %v558, 0.0
        %v623 = vmax.f32 %v563, 0.0
        %v624 = vmax.f32 %v566, 0.0
        %v625 = vmax.f32 %v571, 0.0
        %v626 = vmax.f32 %v574, 0.0
        %v627 = vmax.f32 %v579, 0.0
        %v628 = vmax.f32 %v582, 0.0
        %v629 = vmax.f32 %v587, 0.0
        %v630 = vmax.f32 %v590, 0.0
        %v631 = vmax.f32 %v595, 0.0
        %v632 = vmax.f32 %v598, 0.0
        %v633 = vadd.f32 %v601, %v602
        %v634 = vadd.f32 %v603, %v604
        %v635 = vadd.f32 %v605, %v606
        %v636 = vadd.f32 %v607, %v608
        %v637 = vadd.f32 %v609, %v610
        %v638 = vadd.f32 %v611, %v612
        %v639 = vadd.f32 %v613, %v614
        %v640 = vadd.f32 %v615, %v616
        %v641 = vadd.f32 %v617, %v618
        %v642 = vadd.f32 %v619, %v620
        %v643 = vadd.f32 %v621, %v622
        %v644 = vadd.f32 %v623, %v624
        %v645 = vadd.f32 %v625, %v626
        %v646 = vadd.f32 %v627, %v628
        %v647 = vadd.f32 %v629, %v630
        %v648 = vadd.f32 %v631, %v632
        %v649 = vadd.f32 %v633, %v634
        %v650 = vadd.f32 %v635, %v636
        %v651 = vadd.f32 %v637, %v638
        %v652 = vadd.f32 %v639, %v640
        %v653 = vadd.f32 %v641, %v642
        %v654 = vadd.f32 %v643, %v644
        %v655 = vadd.f32 %v645, %v646
        %v656 = vadd.f32 %v647, %v648
        %v657 = vadd.f32 %v649, %v650
        %v658 = vadd.f32 %v651, %v652
        %v659 = vadd.f32 %v653, %v654
        %v660 = vadd.f32 %v655, %v656
        %v661 = vadd.f32 %v657, %v658
        %v662 = vadd.f32 %v659, %v660
        %v663 = vadd.f32 %v661, %v662
        %v664 = vld [vmem:[#allocation2] sm:$0xff]
        %v665 = vadd.f32 %v664, %v663
        %666 = vst [vmem:[#allocation2] sm:$0xff] %v665
        // Predicated region
        $region45: #{ssl_classifier_forward.1} parent=39 // pred_check
          %p667 = pneg %p251
        $region46: #{ssl_classifier_forward.1} parent=39 // pred_check_branch
          %669 = sbr.rel (%p667) target = $region48
        $region47: #{ssl_classifier_forward.1} parent=39 // pred_region
          %v670 = vld [vmem:[#allocation2] sm:$0xff]
          %v671 = vrot.slane %v670, 4
          %v672 = vadd.f32 %v670, %v671
          %v673 = vrot.slane %v672, 2
          %v674 = vadd.f32 %v672, %v673
          %v675 = vrot.slane %v674, 1
          %v676 = vadd.f32 %v674, %v675
          %v677 = vmul.f32 %v676, 0.00390625
          %v678 = vpack.c.bf16 %v677, %v677
          %v679 = vld [vmem:[%s3] sm:$0xf]
          %v680 = vld [vmem:[%s3 + $0x4] sm:$0xf]
          %v681 = vld [vmem:[%s3 + $0x8] sm:$0xf]
          %v682 = vld [vmem:[%s3 + $0xc] sm:$0xf]
          %v683 = vld [vmem:[%s3 + $0x10] sm:$0xf]
          %v684 = vld [vmem:[%s3 + $0x14] sm:$0xf]
          %v685 = vld [vmem:[%s3 + $0x18] sm:$0xf]
          %v686 = vld [vmem:[%s3 + $0x1c] sm:$0xf]
          %v687 = vld [vmem:[%s3 + $0x20] sm:$0xf]
          %v688 = vld [vmem:[%s3 + $0x24] sm:$0xf]
          %v689 = vld [vmem:[%s3 + $0x28] sm:$0xf]
          %v690 = vld [vmem:[%s3 + $0x2c] sm:$0xf]
          %v691 = vld [vmem:[%s3 + $0x30] sm:$0xf]
          %v692 = vld [vmem:[%s3 + $0x34] sm:$0xf]
          %v693 = vld [vmem:[%s3 + $0x38] sm:$0xf]
          %v694 = vld [vmem:[%s3 + $0x3c] sm:$0xf]
          %v695 = vld [vmem:[%s4] sm:$0x1]
          %v712 = vunpack.c.l.b16 %v679
          %v713 = vunpack.c.l.b16 %v680
          %v714 = vunpack.c.l.b16 %v681
          %v715 = vunpack.c.l.b16 %v682
          %v716 = vunpack.c.l.b16 %v683
          %v717 = vunpack.c.l.b16 %v684
          %v718 = vunpack.c.l.b16 %v685
          %v719 = vunpack.c.l.b16 %v686
          %v720 = vunpack.c.l.b16 %v687
          %v721 = vunpack.c.l.b16 %v688
          %v722 = vunpack.c.l.b16 %v689
          %v723 = vunpack.c.l.b16 %v690
          %v724 = vunpack.c.l.b16 %v691
          %v725 = vunpack.c.l.b16 %v692
          %v726 = vunpack.c.l.b16 %v693
          %v727 = vunpack.c.l.b16 %v694
          %v728 = vpack.c.b16 %v713, %v712
          %v729 = vpack.c.b16 %v715, %v714
          %v730 = vpack.c.b16 %v717, %v716
          %v731 = vpack.c.b16 %v719, %v718
          %v732 = vpack.c.b16 %v721, %v720
          %v733 = vpack.c.b16 %v723, %v722
          %v734 = vpack.c.b16 %v725, %v724
          %v735 = vpack.c.b16 %v727, %v726
          %744 = vmatprep.subr.bf16.mxu0 0
          %745 = vmatpush1.bf16.msra.mxu0 %v728
          %746 = vmatprep.subr.bf16.mxu0 0
          %747 = vmatpush1.bf16.msra.mxu0 %v729
          %748 = vmatprep.subr.bf16.mxu0 0
          %749 = vmatpush1.bf16.msra.mxu0 %v730
          %750 = vmatprep.subr.bf16.mxu0 0
          %751 = vmatpush1.bf16.msra.mxu0 %v731
          %752 = vmatprep.subr.bf16.mxu0 0
          %753 = vmatpush1.bf16.msra.mxu0 %v732
          %754 = vmatprep.subr.bf16.mxu0 0
          %755 = vmatpush1.bf16.msra.mxu0 %v733
          %756 = vmatprep.subr.bf16.mxu0 0
          %757 = vmatpush1.bf16.msra.mxu0 %v734
          %758 = vmatprep.subr.bf16.mxu0 0
          %759 = vmatpush1.bf16.msra.mxu0 %v735
          %760 = vmatprep.subr.bf16.mxu0 0
          %761 = vmatpush1.bf16.msra.mxu0 0
          %762 = vmatprep.subr.bf16.mxu0 0
          %763 = vmatpush1.bf16.msra.mxu0 0
          %764 = vmatprep.subr.bf16.mxu0 0
          %765 = vmatpush1.bf16.msra.mxu0 0
          %766 = vmatprep.subr.bf16.mxu0 0
          %767 = vmatpush1.bf16.msra.mxu0 0
          %768 = vmatprep.subr.bf16.mxu0 0
          %769 = vmatpush1.bf16.msra.mxu0 0
          %770 = vmatprep.subr.bf16.mxu0 0
          %771 = vmatpush1.bf16.msra.mxu0 0
          %772 = vmatprep.subr.bf16.mxu0 0
          %773 = vmatpush1.bf16.msra.mxu0 0
          %774 = vmatprep.subr.bf16.mxu0 0
          %775 = vmatpush1.bf16.msra.mxu0 0
          %776 = vmatprep.mubr.bf16.mxu0 0
          %777 = vmatmul.mubr.bf16.gmra.mrb[0].mxu0 %v678
          %v778 = vpop.f32.mrb[0].mxu0
          %v779 = vadd.f32 %v695, %v778
          %v780 = vpop.f32.mrb[0].mxu0
          %v781 = vpop.f32.mrb[0].mxu0
          %v782 = vpop.f32.mrb[0].mxu0
          %783 = vdwg.mxu0
          %784 = vst [vmem:[%s239] sm:$0x1] %v779
        $region48: #{ssl_classifier_forward.1} parent=39 // pred_fallthru
          _
        %s785 = sand.u32 %s151, 1
        %s786 = scalar_lea.sflag [#allocation4], %s785
        %s787 = sand.u32 %s151, 1
        %s788 = scalar_lea.vmem [#allocation3], %s787
        // Predicated region
        $region49: #{ssl_classifier_forward.1} parent=39 // pred_check
          %p789 = pneg %p161
        $region50: #{ssl_classifier_forward.1} parent=39 // pred_check_branch
          %791 = sbr.rel (%p789) target = $region52
        $region51: #{ssl_classifier_forward.1} parent=39 // pred_region
          %s793 = ssub.s32 16, 16
          %794 = vsyncadd %s786, %s793
          %s795 = smul.addr %s23, 16
          %s796 = scalar_lea.hbm %s5, %s795
          %s798 = sshll.u32 %s788, 4
          %s799 = int_to_ptr.vmem [resolvable:$true] %s798
          %801 = dma.vmem_to_hbm [thread:$0]  %s799, 16, %s796, %s786
        $region52: #{ssl_classifier_forward.1} parent=39 // pred_fallthru
          _
      $region40: #{ssl_classifier_forward.1} parent=5 // pred_fallthru
        _
      %p802 = scmp.le.s32.totalorder 2, %s14
      // Predicated region
      $region53: #{ssl_classifier_forward.1} parent=5 // pred_check
        %p803 = pneg %p802
      $region54: #{ssl_classifier_forward.1} parent=5 // pred_check_branch
        %805 = sbr.rel (%p803) target = $region56
      $region55: #{ssl_classifier_forward.1} parent=5 // pred_region
        %s806 = ssub.s32 %s14, 2
        // Predicated region
        $region57: #{ssl_classifier_forward.1} parent=55 // pred_check
          %p807 = pneg %p167
        $region58: #{ssl_classifier_forward.1} parent=55 // pred_check_branch
          %809 = sbr.rel (%p807) target = $region60
        $region59: #{ssl_classifier_forward.1} parent=55 // pred_region
          %s810 = sand.u32 %s152, 1
          %s811 = scalar_lea.sflag [#allocation4], %s810
          %s812 = sand.u32 %s152, 1
          %s813 = scalar_lea.vmem [#allocation3], %s812
          %814 = dma.done %s811, 16
        $region60: #{ssl_classifier_forward.1} parent=55 // pred_fallthru
          _
      $region56: #{ssl_classifier_forward.1} parent=5 // pred_fallthru
        _
    $region6: #{ssl_classifier_forward.1} parent=1 // loop_footer
      %s18 = sadd.s32 1, %s14
    $region7: #{ssl_classifier_forward.1} parent=1 // loop_footer_branch
      %13 = sbr.rel target = $region3
    $region8: #{ssl_classifier_forward.1} parent=1 // loop_exit
      _
    %815 = vsyncpa [#allocation4], 1
    %s816 = scalar_lea.sflag [#allocation4], 1
    %817 = vsyncpa %s816, 1

</llo_original>
